<compile_context>
chip_gen: v6e
topology: v6e:2x2x1
jax: 0.10.0
libtpu: 0.0.40
codegen_flags: <defaults>
</compile_context>

<pallas_src>
import functools

import jax
import jax.numpy as jnp
from jax.experimental import pallas as pl
from jax.experimental.pallas import tpu as pltpu


_LANES = 128
_ACC_ROWS = 256                    # fixed accumulator height (128 KiB f32), decoupled from tile
_SINGLE_TILE_MAX_ROWS = 1024       # streams this small run as one tile / one accumulator
_VMEM_LIMIT_BYTES = 32 * 1024 * 1024


def _sublane_multiple(dtype) -> int:
    # f32 -> 8 sublanes, bf16/f16 -> 16, int8/fp8 -> 32 (packed-dtype minimum tiles).
    itemsize = jnp.dtype(dtype).itemsize
    return 8 * max(1, 4 // itemsize)


def _tile_budget_bytes() -> int:
    """Per-input tile byte budget; larger on v7x where HBM is ~2.3x faster."""
    try:
        info = pltpu.get_tpu_info()
        if "7" in str(getattr(info, "chip_version", "")):
            return 4 * 1024 * 1024
    except Exception:
        pass
    return 2 * 1024 * 1024


def _split_stream(x):
    """Flatten x -> ((rows,128) lane-aligned body, ragged tail or None).

    No full-array pad copy: when x.size % 128 == 0 (common) the body is a free
    reshape of the whole array; otherwise only the <128-element tail is handled
    outside the kernel.  Tiny inputs (<128 elements) get a zero dummy body.
    """
    flat = x.reshape(-1)
    n = flat.shape[0]
    n_body = (n // _LANES) * _LANES
    if n_body == 0:
        sub = _sublane_multiple(x.dtype)
        return jnp.zeros((sub, _LANES), x.dtype), flat
    body = jax.lax.slice(flat, (0,), (n_body,)).reshape(n_body // _LANES, _LANES)
    tail = flat[n_body:] if n_body != n else None
    return body, tail


def _pick_tile(rows: int, itemsize: int, budget_bytes: int):
    """Return (tile_rows, acc_rows): tile_rows <= rows and tile_rows % acc_rows == 0."""
    if rows <= _SINGLE_TILE_MAX_ROWS:
        return rows, rows                                  # whole stream in one tile
    budget_rows = max(_ACC_ROWS, budget_bytes // (_LANES * itemsize))
    tile = min((budget_rows // _ACC_ROWS) * _ACC_ROWS,
               (rows // _ACC_ROWS) * _ACC_ROWS)
    return max(tile, _ACC_ROWS), _ACC_ROWS


# ---------------------------------------------------------------------------
# Fused kernel: per-core partial sums of (r - t)^2 and |a| into fixed-size
# VMEM output accumulator blocks.  No scratch, no in-kernel cross-lane reduce.
# ---------------------------------------------------------------------------
def _fused_kernel(r_ref, t_ref, a_ref, o_sq_ref, o_abs_ref, *,
                  steps_per_core,
                  rows_sq, tile_sq, tiles_sq, acc_sq,
                  rows_abs, tile_abs, tiles_abs, acc_abs):
    c = pl.program_id(0)                       # TensorCore slice (parallel axis)
    i = pl.program_id(1)                       # inner step (arbitrary axis)
    g = c * steps_per_core + i                 # global tile index for this step

    @pl.when(i == 0)
    def _():
        # Per-core accumulator init (each core owns its own output block).
        o_sq_ref[...] = jnp.zeros_like(o_sq_ref)
        o_abs_ref[...] = jnp.zeros_like(o_abs_ref)

    def accumulate(out_ref, val, acc_rows):
        tile = val.shape[0]
        if tile == acc_rows:
            out_ref[0] += val
        else:
            # Chunked in-register reduction of the tile into the fixed-size
            # accumulator (leading-dim split: layout-preserving, pure VPU adds).
            out_ref[0] += jnp.sum(
                val.reshape(tile // acc_rows, acc_rows, val.shape[1]), axis=0)

    def stream(out_ref, val, rows, tile, tiles, acc_rows):
        if rows % tile == 0:                   # static: blocks exactly cover the slab
            accumulate(out_ref, val, acc_rows)
        else:
            # The last block extends past the slab; OOB rows are garbage and
            # MUST be masked (kept coupled with the mask below).  The mask is
            # gated so every other step is a pure unmasked accumulate.
            last = tiles - 1
            remaining = rows - last * tile     # static python int

            @pl.when(g == last)
            def _():
                row_ids = jax.lax.broadcasted_iota(jnp.int32, val.shape, 0)
                accumulate(out_ref, jnp.where(row_ids < remaining, val, 0.0),
                           acc_rows)

            @pl.when(g != last)
            def _():
                accumulate(out_ref, val, acc_rows)

    # --- squared-difference stream -------------------------------------------
    @pl.when(g < tiles_sq)
    def _():
        d = r_ref[...].astype(jnp.float32) - t_ref[...].astype(jnp.float32)
        stream(o_sq_ref, d * d, rows_sq, tile_sq, tiles_sq, acc_sq)

    # --- L1 (abs) stream ------------------------------------------------------
    @pl.when(g < tiles_abs)
    def _():
        v = jnp.abs(a_ref[...].astype(jnp.float32))
        stream(o_abs_ref, v, rows_abs, tile_abs, tiles_abs, acc_abs)


def _fused_sums(r2, t2, a2):
    rows_sq = r2.shape[0]
    rows_abs = a2.shape[0]
    budget = _tile_budget_bytes()
    tile_sq, acc_sq = _pick_tile(rows_sq, jnp.dtype(r2.dtype).itemsize, budget)
    tile_abs, acc_abs = _pick_tile(rows_abs, jnp.dtype(a2.dtype).itemsize, budget)
    tiles_sq = -(-rows_sq // tile_sq)
    tiles_abs = -(-rows_abs // tile_abs)

    num_cores = 2                                   # v7x dual-TC; harmless on 1-TC chips
    total_tiles = max(tiles_sq, tiles_abs)
    steps_per_core = -(-total_tiles // num_cores)

    kernel = functools.partial(
        _fused_kernel, steps_per_core=steps_per_core,
        rows_sq=rows_sq, tile_sq=tile_sq, tiles_sq=tiles_sq, acc_sq=acc_sq,
        rows_abs=rows_abs, tile_abs=tile_abs, tiles_abs=tiles_abs, acc_abs=acc_abs)

    # Clamped index maps: once a stream is exhausted its block index stays
    # constant, so Pallas elides the re-DMA; pl.when skips the compute.
    sq_map = lambda c, i: (jnp.minimum(c * steps_per_core + i, tiles_sq - 1), 0)
    abs_map = lambda c, i: (jnp.minimum(c * steps_per_core + i, tiles_abs - 1), 0)

    out_sq, out_abs = pl.pallas_call(
        kernel,
        out_shape=(jax.ShapeDtypeStruct((num_cores, acc_sq, _LANES), jnp.float32),
                   jax.ShapeDtypeStruct((num_cores, acc_abs, _LANES), jnp.float32)),
        grid_spec=pltpu.PrefetchScalarGridSpec(
            num_scalar_prefetch=0,
            grid=(num_cores, steps_per_core),
            in_specs=[
                pl.BlockSpec((tile_sq, _LANES), sq_map),
                pl.BlockSpec((tile_sq, _LANES), sq_map),
                pl.BlockSpec((tile_abs, _LANES), abs_map),
            ],
            out_specs=(
                pl.BlockSpec((1, acc_sq, _LANES), lambda c, i: (c, 0, 0)),
                pl.BlockSpec((1, acc_abs, _LANES), lambda c, i: (c, 0, 0)),
            ),
        ),
        compiler_params=pltpu.CompilerParams(
            dimension_semantics=("parallel", "arbitrary"),
            vmem_limit_bytes=_VMEM_LIMIT_BYTES),
    )(r2, t2, a2)

    # Tiny epilogue reduce (2 x acc_rows x 128 each) in plain JAX.
    return jnp.sum(out_sq), jnp.sum(out_abs)


# ---------------------------------------------------------------------------
# SparsityMSE forward
# ---------------------------------------------------------------------------
@functools.partial(jax.jit, static_argnames=("reduction",))
def sparsity_mse(reconstruction, target, activations, sparsity_penalty,
                 reduction: str = "mean"):
    if reduction not in ("mean", "sum"):
        # TODO(synk): reduction='none' (elementwise MSE tensor + broadcast scalar L1)
        # is not supported by this scalar-loss kernel.
        raise ValueError(f"unsupported reduction: {reduction}")

    r2, r_tail = _split_stream(reconstruction)
    t2, t_tail = _split_stream(target)
    a2, a_tail = _split_stream(activations)

    sq_sum, abs_sum = _fused_sums(r2, t2, a2)

    # Ragged (<128-element) tails reduced in plain JAX -- avoids any full-array
    # pad copy in front of the single-pass, HBM-bound kernel.
    if r_tail is not None:
        dt = r_tail.astype(jnp.float32) - t_tail.astype(jnp.float32)
        sq_sum = sq_sum + jnp.sum(dt * dt)
    if a_tail is not None:
        abs_sum = abs_sum + jnp.sum(jnp.abs(a_tail.astype(jnp.float32)))

    if reduction == "mean":
        mse = sq_sum / jnp.float32(reconstruction.size)
    else:
        mse = sq_sum
    return mse + jnp.asarray(sparsity_penalty, jnp.float32) * abs_sum


if __name__ == "__main__":
    key = jax.random.PRNGKey(0)
    k1, k2, k3, k4, k5, k6 = jax.random.split(key, 6)

    sparsity_penalty = 1e-3

    # --- small SAE-like shapes: (B, C, H, W) reconstructions, (B, hidden) codes ---
    recon = jax.random.normal(k1, (2, 4, 16, 16), dtype=jnp.float32)
    target = jax.random.normal(k2, (2, 4, 16, 16), dtype=jnp.float32)
    activations = jax.random.normal(k3, (2, 32), dtype=jnp.float32)

    loss = sparsity_mse(recon, target, activations, sparsity_penalty,
                        reduction="mean")
    loss = jax.block_until_ready(loss)
    ref = (jnp.mean((recon - target) ** 2)
           + sparsity_penalty * jnp.sum(jnp.abs(activations)))
    assert jnp.allclose(loss, ref, rtol=1e-5, atol=1e-5), (loss, ref)

    # --- second check: ragged sizes exercising the partial-tile mask, the
    #     chunked accumulator, the dual-core split and the JAX tail path -------
    recon2 = jax.random.normal(k4, (2, 4, 131, 131), dtype=jnp.float32)
    target2 = jax.random.normal(k5, (2, 4, 131, 131), dtype=jnp.float32)
    acts2 = jax.random.normal(k6, (2, 50), dtype=jnp.float32)

    loss2 = sparsity_mse(recon2, target2, acts2, sparsity_penalty,
                         reduction="sum")
    loss2 = jax.block_until_ready(loss2)
    ref2 = (jnp.sum((recon2 - target2) ** 2)
            + sparsity_penalty * jnp.sum(jnp.abs(acts2)))
    assert jnp.allclose(loss2, ref2, rtol=1e-5, atol=1e-4), (loss2, ref2)

    print("KERNEL_OK")
</pallas_src>

<mosaic_0001>
module attributes {stable_mosaic.version = 11 : i64} {
  func.func @_fused_kernel(%arg0: i32, %arg1: i32, %arg2: memref<16x128xf32, #tpu.memory_space<vmem>>, %arg3: memref<16x128xf32, #tpu.memory_space<vmem>>, %arg4: memref<8x128xf32, #tpu.memory_space<vmem>>, %arg5: memref<1x16x128xf32, #tpu.memory_space<vmem>>, %arg6: memref<1x8x128xf32, #tpu.memory_space<vmem>>) attributes {dimension_semantics = [#tpu.dimension_semantics<parallel>, #tpu.dimension_semantics<arbitrary>], iteration_bounds = array<i64: 2, 1>, scalar_prefetch = 0 : i64, scratch_operands = 0 : i64, tpu.core_type = #tpu.core_type<tc>, window_params = [{transform_indices = @transform_0, window_bounds = array<i64: 16, 128>}, {transform_indices = @transform_1, window_bounds = array<i64: 16, 128>}, {transform_indices = @transform_2, window_bounds = array<i64: 8, 128>}, {transform_indices = @transform_3, window_bounds = array<i64: 1, 16, 128>}, {transform_indices = @transform_4, window_bounds = array<i64: 1, 8, 128>}]} {
    %c1_i32 = arith.constant 1 : i32
    %0 = arith.muli %arg0, %c1_i32 : i32
    %1 = arith.addi %0, %arg1 : i32
    %c0_i32 = arith.constant 0 : i32
    %2 = arith.cmpi eq, %arg1, %c0_i32 : i32
    %3 = arith.extui %2 : i1 to i32
    %c0_i32_0 = arith.constant 0 : i32
    %4 = arith.cmpi ne, %3, %c0_i32_0 : i32
    scf.if %4 {
      %cst = arith.constant 0.000000e+00 : f32
      %11 = vector.broadcast %cst : f32 to vector<1x16x128xf32>
      %c0 = arith.constant 0 : index
      %c0_5 = arith.constant 0 : index
      %c0_6 = arith.constant 0 : index
      %12 = vector.load %arg5[%c0, %c0_5, %c0_6] : memref<1x16x128xf32, #tpu.memory_space<vmem>>, vector<1x16x128xf32>
      tpu.vector_store %arg5[%c0, %c0_5, %c0_6], %11 {strides = array<i32>} : memref<1x16x128xf32, #tpu.memory_space<vmem>>, vector<1x16x128xf32>,
      %cst_7 = arith.constant 0.000000e+00 : f32
      %13 = vector.broadcast %cst_7 : f32 to vector<1x8x128xf32>
      %c0_8 = arith.constant 0 : index
      %c0_9 = arith.constant 0 : index
      %c0_10 = arith.constant 0 : index
      %14 = vector.load %arg6[%c0_8, %c0_9, %c0_10] : memref<1x8x128xf32, #tpu.memory_space<vmem>>, vector<1x8x128xf32>
      tpu.vector_store %arg6[%c0_8, %c0_9, %c0_10], %13 {strides = array<i32>} : memref<1x8x128xf32, #tpu.memory_space<vmem>>, vector<1x8x128xf32>,
    } else {
    }
    %c1_i32_1 = arith.constant 1 : i32
    %5 = arith.cmpi slt, %1, %c1_i32_1 : i32
    %6 = arith.extui %5 : i1 to i32
    %c0_i32_2 = arith.constant 0 : i32
    %7 = arith.cmpi ne, %6, %c0_i32_2 : i32
    scf.if %7 {
      %c0 = arith.constant 0 : index
      %c0_5 = arith.constant 0 : index
      %11 = vector.load %arg2[%c0, %c0_5] : memref<16x128xf32, #tpu.memory_space<vmem>>, vector<16x128xf32>
      %c0_6 = arith.constant 0 : index
      %c0_7 = arith.constant 0 : index
      %12 = vector.load %arg3[%c0_6, %c0_7] : memref<16x128xf32, #tpu.memory_space<vmem>>, vector<16x128xf32>
      %13 = arith.subf %11, %12 : vector<16x128xf32>
      %14 = arith.mulf %13, %13 : vector<16x128xf32>
      %c0_8 = arith.constant 0 : index
      %c0_9 = arith.constant 0 : index
      %c0_10 = arith.constant 0 : index
      %15 = vector.load %arg5[%c0_8, %c0_9, %c0_10] : memref<1x16x128xf32, #tpu.memory_space<vmem>>, vector<1x16x128xf32>
      %16 = vector.shape_cast %15 : vector<1x16x128xf32> to vector<16x128xf32>
      %17 = arith.addf %16, %14 : vector<16x128xf32>
      %c0_11 = arith.constant 0 : index
      %c0_12 = arith.constant 0 : index
      %c0_13 = arith.constant 0 : index
      %18 = vector.load %arg5[%c0_11, %c0_12, %c0_13] : memref<1x16x128xf32, #tpu.memory_space<vmem>>, vector<1x16x128xf32>
      %19 = vector.shape_cast %18 : vector<1x16x128xf32> to vector<16x128xf32>
      %20 = vector.shape_cast %17 : vector<16x128xf32> to vector<1x16x128xf32>
      tpu.vector_store %arg5[%c0_11, %c0_12, %c0_13], %20 {strides = array<i32>} : memref<1x16x128xf32, #tpu.memory_space<vmem>>, vector<1x16x128xf32>,
    } else {
    }
    %c1_i32_3 = arith.constant 1 : i32
    %8 = arith.cmpi slt, %1, %c1_i32_3 : i32
    %9 = arith.extui %8 : i1 to i32
    %c0_i32_4 = arith.constant 0 : i32
    %10 = arith.cmpi ne, %9, %c0_i32_4 : i32
    scf.if %10 {
      %c0 = arith.constant 0 : index
      %c0_5 = arith.constant 0 : index
      %11 = vector.load %arg4[%c0, %c0_5] : memref<8x128xf32, #tpu.memory_space<vmem>>, vector<8x128xf32>
      %12 = math.absf %11 : vector<8x128xf32>
      %c0_6 = arith.constant 0 : index
      %c0_7 = arith.constant 0 : index
      %c0_8 = arith.constant 0 : index
      %13 = vector.load %arg6[%c0_6, %c0_7, %c0_8] : memref<1x8x128xf32, #tpu.memory_space<vmem>>, vector<1x8x128xf32>
      %14 = vector.shape_cast %13 : vector<1x8x128xf32> to vector<8x128xf32>
      %15 = arith.addf %14, %12 : vector<8x128xf32>
      %c0_9 = arith.constant 0 : index
      %c0_10 = arith.constant 0 : index
      %c0_11 = arith.constant 0 : index
      %16 = vector.load %arg6[%c0_9, %c0_10, %c0_11] : memref<1x8x128xf32, #tpu.memory_space<vmem>>, vector<1x8x128xf32>
      %17 = vector.shape_cast %16 : vector<1x8x128xf32> to vector<8x128xf32>
      %18 = vector.shape_cast %15 : vector<8x128xf32> to vector<1x8x128xf32>
      tpu.vector_store %arg6[%c0_9, %c0_10, %c0_11], %18 {strides = array<i32>} : memref<1x8x128xf32, #tpu.memory_space<vmem>>, vector<1x8x128xf32>,
    } else {
    }
    return
  }
  func.func @transform_0(%arg0: i32, %arg1: i32) -> (i32, i32) {
    %c1_i32 = arith.constant 1 : i32
    %0 = arith.muli %arg0, %c1_i32 : i32
    %1 = arith.addi %0, %arg1 : i32
    %c0_i32 = arith.constant 0 : i32
    %2 = arith.minsi %1, %c0_i32 : i32
    %c0_i32_0 = arith.constant 0 : i32
    %c0_i32_1 = arith.constant 0 : i32
    return %2, %c0_i32_0 : i32, i32
  }
  func.func @transform_1(%arg0: i32, %arg1: i32) -> (i32, i32) {
    %c1_i32 = arith.constant 1 : i32
    %0 = arith.muli %arg0, %c1_i32 : i32
    %1 = arith.addi %0, %arg1 : i32
    %c0_i32 = arith.constant 0 : i32
    %2 = arith.minsi %1, %c0_i32 : i32
    %c0_i32_0 = arith.constant 0 : i32
    %c0_i32_1 = arith.constant 0 : i32
    return %2, %c0_i32_0 : i32, i32
  }
  func.func @transform_2(%arg0: i32, %arg1: i32) -> (i32, i32) {
    %c1_i32 = arith.constant 1 : i32
    %0 = arith.muli %arg0, %c1_i32 : i32
    %1 = arith.addi %0, %arg1 : i32
    %c0_i32 = arith.constant 0 : i32
    %2 = arith.minsi %1, %c0_i32 : i32
    %c0_i32_0 = arith.constant 0 : i32
    %c0_i32_1 = arith.constant 0 : i32
    return %2, %c0_i32_0 : i32, i32
  }
  func.func @transform_3(%arg0: i32, %arg1: i32) -> (i32, i32, i32) {
    %c0_i32 = arith.constant 0 : i32
    %c0_i32_0 = arith.constant 0 : i32
    %c0_i32_1 = arith.constant 0 : i32
    return %arg0, %c0_i32, %c0_i32_0 : i32, i32, i32
  }
  func.func @transform_4(%arg0: i32, %arg1: i32) -> (i32, i32, i32) {
    %c0_i32 = arith.constant 0 : i32
    %c0_i32_0 = arith.constant 0 : i32
    %c0_i32_1 = arith.constant 0 : i32
    return %arg0, %c0_i32, %c0_i32_0 : i32, i32, i32
  }
}

</mosaic_0001>

<llo_original>
// kernel: sparsity_mse.1
$region0: #{sparsity_mse.1}
  #allocation0 [shape = 'u32[]', space=smem, size = 0x4, offset = 0x4, fixed_abs, tag = 'smem constant byte address 0x4 - core index']
  #allocation1 [shape = 'u32[144,128]{1,0:T(1,128)}', space=vmem, size = 0x12000, scoped, tag = 'internal scratch']
  %s0 = inlined_call_operand.vmem [shape: f32[16,128], index: 0, kind: input, shape index: {}]
  %s1 = inlined_call_operand.vmem [shape: f32[16,128], index: 1, kind: input, shape index: {}]
  %s2 = inlined_call_operand.vmem [shape: f32[8,128], index: 2, kind: input, shape index: {}]
  %s3 = inlined_call_operand.vmem [shape: f32[2,16,128], index: 3, kind: output, shape index: {0}]
  %s4 = inlined_call_operand.vmem [shape: f32[2,8,128], index: 4, kind: output, shape index: {1}]
  %5 = xla_tuple %s3, %s4
  %s6 = sld [smem:[#allocation0]]
  $region61: #{sparsity_mse.1} parent=0
    _
  %s8 = ssub.s32 1, %s6
  %s9 = scalar_select 0, %s8, %s6
  loop: start=0, step=1, limit=4
  $region2: #{sparsity_mse.1} parent=0 // loop_pre_header
    _
  $region3: #{sparsity_mse.1} parent=0 // loop_header
    %s11 = sphi 0, %s15
    %p12 = scmp.ge.s32.totalorder %s11, 4
    %s18 = sphi 0, %s30
    %s19 = sphi 0, %s26
    %s20 = sphi 0, %s18
    %s21 = sphi 0, %s19
    %s22 = sphi 0, %s20
    %s23 = sphi 0, %s21
    %s39 = sphi 0, %s41
    %s42 = sphi 0, %s39
    %s43 = sphi 0, %s42
    %s59 = sphi 0, %s43
    %s71 = sphi 0, %s73
    %s74 = sphi 0, %s71
    %s75 = sphi 0, %s74
    %s91 = sphi 0, %s75
    %s103 = sphi 0, %s105
    %s106 = sphi 0, %s103
    %s107 = sphi 0, %s106
    %s123 = sphi 0, %s107
    %s129 = sphi 0, %s131
    %s132 = sphi 0, %s129
    %s133 = sphi 0, %s132
    %s149 = sphi 0, %s133
    %s155 = sphi 0, %s157
    %s158 = sphi 0, %s155
    %s159 = sphi 0, %s158
    %s175 = sphi 0, %s159
  $region4: #{sparsity_mse.1} parent=0 // loop_header_branch
    %14 = sbr.rel (%p12) target = $region8
  $region5: #{sparsity_mse.1} parent=0 // loop_body
    %s16 = ssub.s32 %s11, 1
    %s17 = ssub.s32 %s11, 2
    %s24 = sadd.s32 1, %s19
    %p25 = scmp.ge.s32.totalorder %s24, 1
    %s26 = scalar_select %p25, 0, %s24
    %s27 = sadd.s32 1, %s18
    %s28 = scalar_select %p25, %s27, %s18
    %p29 = scmp.ge.s32.totalorder %s28, 2
    %s30 = scalar_select %p29, 0, %s28
    %s31 = sadd.s32 %s18, %s19
    %p32 = scmp.lt.s32.totalorder %s31, 0
    %s33 = scalar_select %p32, %s31, 0
    %s34 = sadd.s32 %s30, %s26
    %p35 = scmp.lt.s32.totalorder %s34, 0
    %s36 = scalar_select %p35, %s34, 0
    %s37 = ssub.s32 %s33, %s36
    %p38 = scmp.eq.s32.totalorder %s37, 0
    %s40 = sadd.s32 %s39, 1
    %s41 = scalar_select %p38, %s39, %s40
    %p44 = pneg %p38
    %p45 = scmp.eq.s32.totalorder %s11, 1
    %p46 = por %p44, %p45
    %p47 = scmp.ne.s32.totalorder %s39, %s42
    %p48 = scmp.eq.s32.totalorder %s11, 0
    %p49 = por %p47, %p48
    %p50 = scmp.ne.s32.totalorder %s39, %s42
    %p51 = scmp.eq.s32.totalorder %s16, 1
    %p52 = por %p50, %p51
    %p53 = scmp.ne.s32.totalorder %s42, %s43
    %p54 = scmp.eq.s32.totalorder %s16, 0
    %p55 = por %p53, %p54
    %p56 = scmp.ne.s32.totalorder %s42, %s43
    %p57 = scmp.eq.s32.totalorder %s17, 1
    %p58 = por %p56, %p57
    %p60 = scmp.ne.s32.totalorder %s43, %s59
    %p61 = scmp.eq.s32.totalorder %s17, 0
    %p62 = por %p60, %p61
    %s63 = sadd.s32 %s18, %s19
    %p64 = scmp.lt.s32.totalorder %s63, 0
    %s65 = scalar_select %p64, %s63, 0
    %s66 = sadd.s32 %s30, %s26
    %p67 = scmp.lt.s32.totalorder %s66, 0
    %s68 = scalar_select %p67, %s66, 0
    %s69 = ssub.s32 %s65, %s68
    %p70 = scmp.eq.s32.totalorder %s69, 0
    %s72 = sadd.s32 %s71, 1
    %s73 = scalar_select %p70, %s71, %s72
    %p76 = pneg %p70
    %p77 = scmp.eq.s32.totalorder %s11, 1
    %p78 = por %p76, %p77
    %p79 = scmp.ne.s32.totalorder %s71, %s74
    %p80 = scmp.eq.s32.totalorder %s11, 0
    %p81 = por %p79, %p80
    %p82 = scmp.ne.s32.totalorder %s71, %s74
    %p83 = scmp.eq.s32.totalorder %s16, 1
    %p84 = por %p82, %p83
    %p85 = scmp.ne.s32.totalorder %s74, %s75
    %p86 = scmp.eq.s32.totalorder %s16, 0
    %p87 = por %p85, %p86
    %p88 = scmp.ne.s32.totalorder %s74, %s75
    %p89 = scmp.eq.s32.totalorder %s17, 1
    %p90 = por %p88, %p89
    %p92 = scmp.ne.s32.totalorder %s75, %s91
    %p93 = scmp.eq.s32.totalorder %s17, 0
    %p94 = por %p92, %p93
    %s95 = sadd.s32 %s18, %s19
    %p96 = scmp.lt.s32.totalorder %s95, 0
    %s97 = scalar_select %p96, %s95, 0
    %s98 = sadd.s32 %s30, %s26
    %p99 = scmp.lt.s32.totalorder %s98, 0
    %s100 = scalar_select %p99, %s98, 0
    %s101 = ssub.s32 %s97, %s100
    %p102 = scmp.eq.s32.totalorder %s101, 0
    %s104 = sadd.s32 %s103, 1
    %s105 = scalar_select %p102, %s103, %s104
    %p108 = pneg %p102
    %p109 = scmp.eq.s32.totalorder %s11, 1
    %p110 = por %p108, %p109
    %p111 = scmp.ne.s32.totalorder %s103, %s106
    %p112 = scmp.eq.s32.totalorder %s11, 0
    %p113 = por %p111, %p112
    %p114 = scmp.ne.s32.totalorder %s103, %s106
    %p115 = scmp.eq.s32.totalorder %s16, 1
    %p116 = por %p114, %p115
    %p117 = scmp.ne.s32.totalorder %s106, %s107
    %p118 = scmp.eq.s32.totalorder %s16, 0
    %p119 = por %p117, %p118
    %p120 = scmp.ne.s32.totalorder %s106, %s107
    %p121 = scmp.eq.s32.totalorder %s17, 1
    %p122 = por %p120, %p121
    %p124 = scmp.ne.s32.totalorder %s107, %s123
    %p125 = scmp.eq.s32.totalorder %s17, 0
    %p126 = por %p124, %p125
    %s127 = ssub.s32 %s18, %s30
    %p128 = scmp.eq.s32.totalorder %s127, 0
    %s130 = sadd.s32 %s129, 1
    %s131 = scalar_select %p128, %s129, %s130
    %p134 = pneg %p128
    %p135 = scmp.eq.s32.totalorder %s11, 1
    %p136 = por %p134, %p135
    %p137 = scmp.ne.s32.totalorder %s129, %s132
    %p138 = scmp.eq.s32.totalorder %s11, 0
    %p139 = por %p137, %p138
    %p140 = scmp.ne.s32.totalorder %s129, %s132
    %p141 = scmp.eq.s32.totalorder %s16, 1
    %p142 = por %p140, %p141
    %p143 = scmp.ne.s32.totalorder %s132, %s133
    %p144 = scmp.eq.s32.totalorder %s16, 0
    %p145 = por %p143, %p144
    %p146 = scmp.ne.s32.totalorder %s132, %s133
    %p147 = scmp.eq.s32.totalorder %s17, 1
    %p148 = por %p146, %p147
    %p150 = scmp.ne.s32.totalorder %s133, %s149
    %p151 = scmp.eq.s32.totalorder %s17, 0
    %p152 = por %p150, %p151
    %s153 = ssub.s32 %s18, %s30
    %p154 = scmp.eq.s32.totalorder %s153, 0
    %s156 = sadd.s32 %s155, 1
    %s157 = scalar_select %p154, %s155, %s156
    %p160 = pneg %p154
    %p161 = scmp.eq.s32.totalorder %s11, 1
    %p162 = por %p160, %p161
    %p163 = scmp.ne.s32.totalorder %s155, %s158
    %p164 = scmp.eq.s32.totalorder %s11, 0
    %p165 = por %p163, %p164
    %p166 = scmp.ne.s32.totalorder %s155, %s158
    %p167 = scmp.eq.s32.totalorder %s16, 1
    %p168 = por %p166, %p167
    %p169 = scmp.ne.s32.totalorder %s158, %s159
    %p170 = scmp.eq.s32.totalorder %s16, 0
    %p171 = por %p169, %p170
    %p172 = scmp.ne.s32.totalorder %s158, %s159
    %p173 = scmp.eq.s32.totalorder %s17, 1
    %p174 = por %p172, %p173
    %p176 = scmp.ne.s32.totalorder %s159, %s175
    %p177 = scmp.eq.s32.totalorder %s17, 0
    %p178 = por %p176, %p177
    %p179 = scmp.le.s32.totalorder 1, %s11
    %p180 = scmp.lt.s32.totalorder %s11, 3
    %p181 = pnand %p179, %p180
    %p182 = pneg %p181
    // Predicated region
    $region9: #{sparsity_mse.1} parent=5 // pred_check
      _
    $region10: #{sparsity_mse.1} parent=5 // pred_check_branch
      %184 = sbr.rel (%p181) target = $region12
    $region11: #{sparsity_mse.1} parent=5 // pred_region
      %s185 = ssub.s32 %s11, 1
    $region12: #{sparsity_mse.1} parent=5 // pred_fallthru
      _
    %p186 = scmp.lt.s32.totalorder %s11, 2
    // Predicated region
    $region13: #{sparsity_mse.1} parent=5 // pred_check
      %p187 = pneg %p186
    $region14: #{sparsity_mse.1} parent=5 // pred_check_branch
      %189 = sbr.rel (%p187) target = $region16
    $region15: #{sparsity_mse.1} parent=5 // pred_region
      // Predicated region
      $region17: #{sparsity_mse.1} parent=15 // pred_check
        %p190 = pneg %p49
      $region18: #{sparsity_mse.1} parent=15 // pred_check_branch
        %192 = sbr.rel (%p190) target = $region20
      $region19: #{sparsity_mse.1} parent=15 // pred_region
        %s193 = sadd.s32 %s18, %s19
        %p194 = scmp.lt.s32.totalorder %s193, 0
        %s195 = scalar_select %p194, %s193, 0
        %s196 = smul.u32 2, %s195
        %p197 = scmp.lt.s32.totalorder %s196, 1
        %s198 = scalar_select %p197, %s196, 1
        %s199 = smul.addr %s198, 8
        %s200 = scalar_lea.vmem %s0, %s199
        %s201 = sadd.s32 %s18, %s19
        %p202 = scmp.lt.s32.totalorder %s201, 0
        %s203 = scalar_select %p202, %s201, 0
        %s204 = smul.u32 2, %s203
      $region20: #{sparsity_mse.1} parent=15 // pred_fallthru
        _
      // Predicated region
      $region21: #{sparsity_mse.1} parent=15 // pred_check
        %p205 = pneg %p81
      $region22: #{sparsity_mse.1} parent=15 // pred_check_branch
        %207 = sbr.rel (%p205) target = $region24
      $region23: #{sparsity_mse.1} parent=15 // pred_region
        %s208 = sadd.s32 %s18, %s19
        %p209 = scmp.lt.s32.totalorder %s208, 0
        %s210 = scalar_select %p209, %s208, 0
        %s211 = smul.u32 2, %s210
        %p212 = scmp.lt.s32.totalorder %s211, 1
        %s213 = scalar_select %p212, %s211, 1
        %s214 = smul.addr %s213, 8
        %s215 = scalar_lea.vmem %s1, %s214
        %s216 = sadd.s32 %s18, %s19
        %p217 = scmp.lt.s32.totalorder %s216, 0
        %s218 = scalar_select %p217, %s216, 0
        %s219 = smul.u32 2, %s218
      $region24: #{sparsity_mse.1} parent=15 // pred_fallthru
        _
      // Predicated region
      $region25: #{sparsity_mse.1} parent=15 // pred_check
        %p220 = pneg %p113
      $region26: #{sparsity_mse.1} parent=15 // pred_check_branch
        %222 = sbr.rel (%p220) target = $region28
      $region27: #{sparsity_mse.1} parent=15 // pred_region
        %s223 = sadd.s32 %s18, %s19
        %p224 = scmp.lt.s32.totalorder %s223, 0
        %s225 = scalar_select %p224, %s223, 0
        %p226 = scmp.lt.s32.totalorder %s225, 0
        %s227 = scalar_select %p226, %s225, 0
        %s228 = smul.addr %s227, 8
        %s229 = scalar_lea.vmem %s2, %s228
        %s230 = sadd.s32 %s18, %s19
        %p231 = scmp.lt.s32.totalorder %s230, 0
        %s232 = scalar_select %p231, %s230, 0
      $region28: #{sparsity_mse.1} parent=15 // pred_fallthru
        _
    $region16: #{sparsity_mse.1} parent=5 // pred_fallthru
      _
    %p233 = scmp.le.s32.totalorder 1, %s11
    %p234 = scmp.lt.s32.totalorder %s11, 3
    %p235 = pnand %p233, %p234
    %p236 = pneg %p235
    // Predicated region
    $region29: #{sparsity_mse.1} parent=5 // pred_check
      _
    $region30: #{sparsity_mse.1} parent=5 // pred_check_branch
      %238 = sbr.rel (%p235) target = $region32
    $region31: #{sparsity_mse.1} parent=5 // pred_region
      %s239 = ssub.s32 %s11, 1
      %s240 = sadd.s32 %s20, %s21
      %p241 = scmp.lt.s32.totalorder %s240, 0
      %s242 = scalar_select %p241, %s240, 0
      %s243 = smul.u32 2, %s242
      %p244 = scmp.lt.s32.totalorder %s243, 1
      %s245 = scalar_select %p244, %s243, 1
      %s246 = smul.addr %s245, 8
      %s247 = scalar_lea.vmem %s0, %s246
      %p248 = pneg %p55
      %p249 = pneg %p52
      %s250 = sadd.s32 %s20, %s21
      %p251 = scmp.lt.s32.totalorder %s250, 0
      %s252 = scalar_select %p251, %s250, 0
      %s253 = smul.u32 2, %s252
      %p254 = scmp.lt.s32.totalorder %s253, 1
      %s255 = scalar_select %p254, %s253, 1
      %s256 = smul.addr %s255, 8
      %s257 = scalar_lea.vmem %s1, %s256
      %p258 = pneg %p87
      %p259 = pneg %p84
      %s260 = sadd.s32 %s20, %s21
      %p261 = scmp.lt.s32.totalorder %s260, 0
      %s262 = scalar_select %p261, %s260, 0
      %p263 = scmp.lt.s32.totalorder %s262, 0
      %s264 = scalar_select %p263, %s262, 0
      %s265 = smul.addr %s264, 8
      %s266 = scalar_lea.vmem %s2, %s265
      %p267 = pneg %p119
      %p268 = pneg %p116
      %p269 = pneg %p145
      %p270 = pneg %p142
      %p271 = scmp.lt.s32.totalorder %s20, 1
      %s272 = scalar_select %p271, %s20, 1
      %s273 = smul.addr %s272, 2
      %s274 = smul.addr %s273, 8
      %s275 = scalar_lea.vmem %s3, %s274
      %p276 = pneg %p171
      %p277 = pneg %p168
      %p278 = scmp.lt.s32.totalorder %s20, 1
      %s279 = scalar_select %p278, %s20, 1
      %s280 = smul.addr %s279, 8
      %s281 = scalar_lea.vmem %s4, %s280
      %s282 = sadd.s32 %s20, %s21
      %p283 = scmp.lt.s32.totalorder %s282, 0
      %s284 = scalar_select %p283, %s282, 0
      %s285 = smul.u32 2, %s284
      %p286 = scmp.lt.s32.totalorder %s285, 1
      %s287 = scalar_select %p286, %s285, 1
      %s288 = smul.addr %s287, 8
      %s289 = scalar_lea.vmem %s0, %s288
      %s290 = sadd.s32 %s20, %s21
      %p291 = scmp.lt.s32.totalorder %s290, 0
      %s292 = scalar_select %p291, %s290, 0
      %s293 = smul.u32 2, %s292
      %s294 = sadd.s32 %s20, %s21
      %p295 = scmp.lt.s32.totalorder %s294, 0
      %s296 = scalar_select %p295, %s294, 0
      %s297 = smul.u32 2, %s296
      %p298 = scmp.lt.s32.totalorder %s297, 1
      %s299 = scalar_select %p298, %s297, 1
      %s300 = smul.addr %s299, 8
      %s301 = scalar_lea.vmem %s1, %s300
      %s302 = sadd.s32 %s20, %s21
      %p303 = scmp.lt.s32.totalorder %s302, 0
      %s304 = scalar_select %p303, %s302, 0
      %s305 = smul.u32 2, %s304
      %s306 = sadd.s32 %s20, %s21
      %p307 = scmp.lt.s32.totalorder %s306, 0
      %s308 = scalar_select %p307, %s306, 0
      %p309 = scmp.lt.s32.totalorder %s308, 0
      %s310 = scalar_select %p309, %s308, 0
      %s311 = smul.addr %s310, 8
      %s312 = scalar_lea.vmem %s2, %s311
      %s313 = sadd.s32 %s20, %s21
      %p314 = scmp.lt.s32.totalorder %s313, 0
      %s315 = scalar_select %p314, %s313, 0
      %p316 = scmp.lt.s32.totalorder %s20, 1
      %s317 = scalar_select %p316, %s20, 1
      %s318 = smul.addr %s317, 2
      %s319 = smul.addr %s318, 8
      %s320 = scalar_lea.vmem %s3, %s319
      %p321 = scmp.lt.s32.totalorder %s20, 1
      %s322 = scalar_select %p321, %s20, 1
      %s323 = smul.addr %s322, 8
      %s324 = scalar_lea.vmem %s4, %s323
      %s325 = sadd.s32 %s20, %s21
      %p326 = scmp.eq.s32.totalorder %s21, 0
      // Predicated region
      $region33: #{sparsity_mse.1} parent=31 // pred_check
        %p327 = pneg %p326
      $region34: #{sparsity_mse.1} parent=31 // pred_check_branch
        %329 = sbr.rel (%p327) target = $region36
      $region35: #{sparsity_mse.1} parent=31 // pred_region
        %330 = vst [vmem:[%s320] sm:$0xff] 0.0
        %331 = vst [vmem:[%s320 + $0x8] sm:$0xff] 0.0
        %332 = vst [vmem:[%s324] sm:$0xff] 0.0
      $region36: #{sparsity_mse.1} parent=31 // pred_fallthru
        _
      %p333 = scmp.lt.s32.totalorder %s325, 1
      // Predicated region
      $region37: #{sparsity_mse.1} parent=31 // pred_check
        %p334 = pneg %p333
      $region38: #{sparsity_mse.1} parent=31 // pred_check_branch
        %336 = sbr.rel (%p334) target = $region40
      $region39: #{sparsity_mse.1} parent=31 // pred_region
        %v337 = vld [vmem:[%s289] sm:$0xff]
        %v338 = vld [vmem:[%s289 + $0x8] sm:$0xff]
        %v339 = vld [vmem:[%s301] sm:$0xff]
        %v340 = vld [vmem:[%s301 + $0x8] sm:$0xff]
        %v341 = vsub.f32 %v337, %v339
        %v342 = vsub.f32 %v338, %v340
        %v343 = vmul.f32 %v341, %v341
        %v344 = vmul.f32 %v342, %v342
        %v345 = vld [vmem:[%s320] sm:$0xff]
        %v346 = vld [vmem:[%s320 + $0x8] sm:$0xff]
        %v347 = vadd.f32 %v345, %v343
        %v348 = vadd.f32 %v346, %v344
        %349 = vst [vmem:[%s320] sm:$0xff] %v347
        %350 = vst [vmem:[%s320 + $0x8] sm:$0xff] %v348
        %v351 = vld [vmem:[%s312] sm:$0xff]
        %v352 = vand.u32 2147483647, %v351
        %v353 = vld [vmem:[%s324] sm:$0xff]
        %v354 = vadd.f32 %v353, %v352
        %355 = vst [vmem:[%s324] sm:$0xff] %v354
      $region40: #{sparsity_mse.1} parent=31 // pred_fallthru
        _
      %p356 = scmp.lt.s32.totalorder %s20, 1
      %s357 = scalar_select %p356, %s20, 1
      %s358 = smul.addr %s357, 2
      %s359 = smul.addr %s358, 8
      %s360 = scalar_lea.vmem %s3, %s359
      %p361 = scmp.lt.s32.totalorder %s20, 1
      %s362 = scalar_select %p361, %s20, 1
      %s363 = smul.addr %s362, 8
      %s364 = scalar_lea.vmem %s4, %s363
      // Predicated region
      $region41: #{sparsity_mse.1} parent=31 // pred_check
        %p365 = pneg %p142
      $region42: #{sparsity_mse.1} parent=31 // pred_check_branch
        %367 = sbr.rel (%p365) target = $region44
      $region43: #{sparsity_mse.1} parent=31 // pred_region
        _
      $region44: #{sparsity_mse.1} parent=31 // pred_fallthru
        _
      // Predicated region
      $region45: #{sparsity_mse.1} parent=31 // pred_check
        %p368 = pneg %p168
      $region46: #{sparsity_mse.1} parent=31 // pred_check_branch
        %370 = sbr.rel (%p368) target = $region48
      $region47: #{sparsity_mse.1} parent=31 // pred_region
        _
      $region48: #{sparsity_mse.1} parent=31 // pred_fallthru
        _
    $region32: #{sparsity_mse.1} parent=5 // pred_fallthru
      _
    %p371 = scmp.le.s32.totalorder 2, %s11
    // Predicated region
    $region49: #{sparsity_mse.1} parent=5 // pred_check
      %p372 = pneg %p371
    $region50: #{sparsity_mse.1} parent=5 // pred_check_branch
      %374 = sbr.rel (%p372) target = $region52
    $region51: #{sparsity_mse.1} parent=5 // pred_region
      %s375 = ssub.s32 %s11, 2
      // Predicated region
      $region53: #{sparsity_mse.1} parent=51 // pred_check
        %p376 = pneg %p148
      $region54: #{sparsity_mse.1} parent=51 // pred_check_branch
        %378 = sbr.rel (%p376) target = $region56
      $region55: #{sparsity_mse.1} parent=51 // pred_region
        %p379 = scmp.lt.s32.totalorder %s22, 1
        %s380 = scalar_select %p379, %s22, 1
        %s381 = smul.addr %s380, 2
        %s382 = smul.addr %s381, 8
        %s383 = scalar_lea.vmem %s3, %s382
      $region56: #{sparsity_mse.1} parent=51 // pred_fallthru
        _
      // Predicated region
      $region57: #{sparsity_mse.1} parent=51 // pred_check
        %p384 = pneg %p174
      $region58: #{sparsity_mse.1} parent=51 // pred_check_branch
        %386 = sbr.rel (%p384) target = $region60
      $region59: #{sparsity_mse.1} parent=51 // pred_region
        %p387 = scmp.lt.s32.totalorder %s22, 1
        %s388 = scalar_select %p387, %s22, 1
        %s389 = smul.addr %s388, 8
        %s390 = scalar_lea.vmem %s4, %s389
      $region60: #{sparsity_mse.1} parent=51 // pred_fallthru
        _
    $region52: #{sparsity_mse.1} parent=5 // pred_fallthru
      _
  $region6: #{sparsity_mse.1} parent=0 // loop_footer
    %s15 = sadd.s32 1, %s11
  $region7: #{sparsity_mse.1} parent=0 // loop_footer_branch
    %10 = sbr.rel target = $region3
  $region8: #{sparsity_mse.1} parent=0 // loop_exit
    _

</llo_original>
